<compile_context>
chip_gen: v7x
topology: tpu7x:2x2x1
jax: 0.10.0
libtpu: 0.0.40
codegen_flags: <defaults>
</compile_context>

<pallas_src>
import functools

import jax
import jax.numpy as jnp
from jax import lax
from jax.experimental import pallas as pl
from jax.experimental.pallas import tpu as pltpu


_LANE = 128  # lane width; TB alignment so (1, TB) outputs store unmasked


def _quantize_kernel(z_ref, embed_ref, half_esq_ref, ind_ref, rsq_ref, *, compute_dtype):
    z = z_ref[...]                       # (TB, C) f32 batch tile (pipelined)
    e = embed_ref[...]                   # (K, C)  f32 codebook (resident across tiles)
    half_esq = half_esq_ref[...]         # (K, 1)  f32 0.5*|e_k|^2 (resident, hoisted)
    tb, c = z.shape
    k = e.shape[0]

    zc = z.astype(compute_dtype)
    ec = e.astype(compute_dtype)

    # Transposed cross term on the MXU: cross_t[k, b] = e_k . z_b  -> (K, TB).
    # Keeping the batch on the lane axis makes every downstream reduction land as a
    # lane-dense (1, TB) row (unmasked stores, no relayout).
    cross_t = lax.dot_general(ec, zc, (((1,), (1,)), ((), ())),
                              preferred_element_type=jnp.float32)      # (K, TB)

    # score = z.e - 0.5|e|^2 = -(dist - |z|^2)/2  =>  argmax(score) == argmin(dist).
    score = cross_t - half_esq                                         # (K, TB)

    max_s = jnp.max(score, axis=0, keepdims=True)                      # (1, TB)

    # First index on ties (matches torch's (-dist).max(1) / first argmin).
    k_iota = lax.broadcasted_iota(jnp.int32, (k, tb), 0)
    ind_ref[...] = jnp.min(jnp.where(score >= max_s, k_iota, k),
                           axis=0, keepdims=True)                      # (1, TB) int32

    # Per-row SSE via  |z - e[ind]|^2 = |z|^2 - 2 * max_score  (exact for f32 cross).
    # |z|^2 is produced directly as a (1, TB) row with a tiny ones-row MXU pass.
    zsq = lax.dot_general(jnp.ones((1, c), jnp.float32), z * z,
                          (((1,), (1,)), ((), ())),
                          preferred_element_type=jnp.float32)           # (1, TB)
    rsq_ref[...] = jnp.maximum(zsq - 2.0 * max_s, 0.0)                 # clamp fp cancellation


def _pick_block(B, C, K, block_b=None):
    """Pick the batch tile TB and an explicit VMEM limit, generation-aware."""
    try:
        info = pltpu.get_tpu_info()
        vmem_cap = int(getattr(info, "vmem_capacity_bytes", 64 << 20))
    except Exception:
        vmem_cap = 64 << 20              # v7x per-TC capacity as the safe lower bound
    vmem_limit = min(int(vmem_cap * 0.7), 96 << 20)

    if block_b is None:
        # Live f32 bytes ~ double-buffered z in (2*TB*C) + resident codebook (2*K*C)
        # + (K, TB) cross/score/iota/select intermediates (~4*K*TB) + tiny (1, TB) outs.
        budget = vmem_limit // 2         # leave headroom for compiler scratch/spills
        fixed = 2 * K * C * 4 + 2 * K * 4
        per_row = 4 * (2 * C + 4 * K) + 64
        tb = max(_LANE, (budget - fixed) // per_row)
    else:
        tb = int(block_b)

    # Keep >= 2 grid steps for big batches so the "parallel" axis can shard across both
    # TensorCores on v7x (a harmless 2-step loop on single-TC v5e/v6e).
    if B >= 2 * _LANE:
        half = ((-(-B // 2) + _LANE - 1) // _LANE) * _LANE
        tb = min(tb, half)

    if tb >= B:
        return B, vmem_limit             # single tile; block dims == array dims (always legal)
    tb = max(_LANE, (tb // _LANE) * _LANE)   # lane-aligned so (1, TB) outputs stay dense
    return int(tb), vmem_limit


def quantize_forward(z, embed_w, *, kld_scale=10.0, commitment_cost=0.25,
                     block_b=None, use_bf16_matmul=False):
    """Pallas forward of Quantize. Returns (z_q, [diff0, diff1], ind)."""
    z = z.astype(jnp.float32)
    embed_w = embed_w.astype(jnp.float32)
    B, C = z.shape
    K, Ce = embed_w.shape
    assert Ce == C

    tb, vmem_limit = _pick_block(B, C, K, block_b)
    num_tiles = pl.cdiv(B, tb)

    # Grid-invariant 0.5*|e_k|^2 column, hoisted out of the grid loop (and the -2 folded).
    half_esq = 0.5 * jnp.sum(embed_w * embed_w, axis=1, keepdims=True)   # (K, 1)

    compute_dtype = jnp.bfloat16 if use_bf16_matmul else jnp.float32
    kernel = functools.partial(_quantize_kernel, compute_dtype=compute_dtype)

    ind_row, rsq_row = pl.pallas_call(
        kernel,
        out_shape=(
            jax.ShapeDtypeStruct((1, B), jnp.int32),     # codebook indices (lane-dense)
            jax.ShapeDtypeStruct((1, B), jnp.float32),   # per-row SSE      (lane-dense)
        ),
        grid_spec=pltpu.PrefetchScalarGridSpec(
            num_scalar_prefetch=0,
            grid=(num_tiles,),
            in_specs=[
                pl.BlockSpec((tb, C), lambda i: (i, 0)),   # z tile (pipelined; ragged tail OK)
                pl.BlockSpec((K, C), lambda i: (0, 0)),    # codebook, resident
                pl.BlockSpec((K, 1), lambda i: (0, 0)),    # 0.5*|e|^2, resident
            ],
            out_specs=[
                pl.BlockSpec((1, tb), lambda i: (0, i)),   # ind (OOB lanes masked on write)
                pl.BlockSpec((1, tb), lambda i: (0, i)),   # per-row SSE
            ],
        ),
        compiler_params=pltpu.CompilerParams(
            dimension_semantics=("parallel",),
            vmem_limit_bytes=vmem_limit),
    )(z, embed_w, half_esq)

    ind = ind_row[0]                                    # (B,) int32
    z_q = jnp.take(embed_w, ind, axis=0)                # straight-through forward: E[ind]

    if use_bf16_matmul:
        # bf16 cross term would bias the SSE identity; recompute the loss exactly from z_q.
        mse = jnp.mean((z_q - z) ** 2)
    else:
        mse = jnp.sum(rsq_row[0]) / float(B * C)
    diff = [commitment_cost * kld_scale * mse, kld_scale * mse]
    return z_q, diff, ind


def _reference_forward(z, embed_w, *, kld_scale=10.0, commitment_cost=0.25,
                       mirror_bf16=False):
    """Pure-JAX reference. mirror_bf16=True mimics the kernel's bf16 cross term."""
    if mirror_bf16:
        zc = z.astype(jnp.bfloat16).astype(jnp.float32)
        ec = embed_w.astype(jnp.bfloat16).astype(jnp.float32)
    else:
        zc, ec = z, embed_w
    dist = (jnp.sum(z * z, axis=1, keepdims=True)
            - 2.0 * jnp.dot(zc, ec.T, precision=lax.Precision.HIGHEST)
            + jnp.sum(embed_w * embed_w, axis=1)[None, :])
    ind = jnp.argmin(dist, axis=1)
    z_q = embed_w[ind]
    mse = jnp.mean((z_q - z) ** 2)
    return z_q, [commitment_cost * kld_scale * mse, kld_scale * mse], ind


if __name__ == "__main__":
    key = jax.random.PRNGKey(0)
    k1, k2, k3, k4 = jax.random.split(key, 4)

    # Case 1: module-scale small shapes (z is (B, num_hiddens)), exact f32 path, single tile.
    B, num_hiddens, n_embed = 8, 32, 16
    z = jax.random.normal(k1, (B, num_hiddens), dtype=jnp.float32)
    embed_w = jax.random.normal(k2, (n_embed, num_hiddens), dtype=jnp.float32)

    z_q, diff, ind = quantize_forward(z, embed_w, use_bf16_matmul=False)
    jax.block_until_ready(z_q)
    jax.block_until_ready(ind)

    z_q_r, diff_r, ind_r = _reference_forward(z, embed_w)
    assert jnp.array_equal(ind, ind_r), "case1: ind mismatch"
    assert jnp.allclose(z_q, z_q_r, atol=1e-5), "case1: z_q mismatch"
    assert jnp.allclose(jnp.stack(diff), jnp.stack(diff_r), rtol=1e-4, atol=1e-5), "case1: loss mismatch"

    # Case 2: ragged multi-tile batch (grid=2, masked tail writes) with bf16 cross term.
    B2 = 200
    z2 = jax.random.normal(k3, (B2, num_hiddens), dtype=jnp.float32)
    embed2 = jax.random.normal(k4, (n_embed, num_hiddens), dtype=jnp.float32)

    z_q2, diff2, ind2 = quantize_forward(z2, embed2, block_b=128, use_bf16_matmul=True)
    jax.block_until_ready(z_q2)
    jax.block_until_ready(ind2)

    z_q2_r, diff2_r, ind2_r = _reference_forward(z2, embed2, mirror_bf16=True)
    assert jnp.array_equal(ind2, ind2_r), "case2: ind mismatch"
    assert jnp.allclose(z_q2, z_q2_r, atol=1e-5), "case2: z_q mismatch"
    assert jnp.allclose(jnp.stack(diff2), jnp.stack(diff2_r), rtol=1e-4, atol=1e-5), "case2: loss mismatch"

    print("KERNEL_OK")
</pallas_src>

<mosaic_0001>
module attributes {stable_mosaic.version = 11 : i64} {
  func.func @_quantize_kernel(%arg0: i32, %arg1: memref<8x32xf32, #tpu.memory_space<vmem>>, %arg2: memref<16x32xf32, #tpu.memory_space<vmem>>, %arg3: memref<16x1xf32, #tpu.memory_space<vmem>>, %arg4: memref<1x8xi32, #tpu.memory_space<vmem>>, %arg5: memref<1x8xf32, #tpu.memory_space<vmem>>) attributes {dimension_semantics = [#tpu.dimension_semantics<parallel>], iteration_bounds = array<i64: 1>, scalar_prefetch = 0 : i64, scratch_operands = 0 : i64, tpu.core_type = #tpu.core_type<tc>, window_params = [{transform_indices = @transform_0, window_bounds = array<i64: 8, 32>}, {pipeline_mode = #tpu.pipeline_mode<synchronous>, transform_indices = @transform_1, window_bounds = array<i64: 16, 32>}, {pipeline_mode = #tpu.pipeline_mode<synchronous>, transform_indices = @transform_2, window_bounds = array<i64: 16, 1>}, {transform_indices = @transform_3, window_bounds = array<i64: 1, 8>}, {transform_indices = @transform_4, window_bounds = array<i64: 1, 8>}]} {
    %c0 = arith.constant 0 : index
    %c0_0 = arith.constant 0 : index
    %0 = vector.load %arg1[%c0, %c0_0] : memref<8x32xf32, #tpu.memory_space<vmem>>, vector<8x32xf32>
    %c0_1 = arith.constant 0 : index
    %c0_2 = arith.constant 0 : index
    %1 = vector.load %arg2[%c0_1, %c0_2] : memref<16x32xf32, #tpu.memory_space<vmem>>, vector<16x32xf32>
    %c0_3 = arith.constant 0 : index
    %c0_4 = arith.constant 0 : index
    %2 = vector.load %arg3[%c0_3, %c0_4] : memref<16x1xf32, #tpu.memory_space<vmem>>, vector<16x1xf32>
    %cst = arith.constant dense<0.000000e+00> : vector<16x8xf32>
    %3 = tpu.matmul %1, %0, %cst {dimension_numbers = #tpu.dot_dimension_numbers<[1], [1], [0], [0], [0, 0, 1, 0], [], []>} : vector<16x32xf32>, vector<8x32xf32>, vector<16x8xf32> -> vector<16x8xf32>
    %4 = vector.broadcast %2 : vector<16x1xf32> to vector<16x8xf32>
    %5 = arith.subf %3, %4 : vector<16x8xf32>
    %cst_5 = arith.constant dense<0xFF800000> : vector<8xf32>
    %6 = vector.multi_reduction <maximumf>, %5, %cst_5 [0] : vector<16x8xf32> to vector<8xf32>
    %7 = vector.shape_cast %6 : vector<8xf32> to vector<1x8xf32>
    %8 = tpu.iota {dimensions = array<i32: 0>} : vector<16x8xi32>
    %9 = vector.broadcast %7 : vector<1x8xf32> to vector<16x8xf32>
    %10 = arith.cmpf oge, %5, %9 : vector<16x8xf32>
    %c16_i32 = arith.constant 16 : i32
    %11 = vector.broadcast %c16_i32 : i32 to vector<16x8xi32>
    %12 = arith.select %10, %8, %11 : vector<16x8xi1>, vector<16x8xi32>
    %cst_6 = arith.constant dense<2147483647> : vector<8xi32>
    %13 = vector.multi_reduction <minsi>, %12, %cst_6 [0] : vector<16x8xi32> to vector<8xi32>
    %14 = vector.shape_cast %13 : vector<8xi32> to vector<1x8xi32>
    %c0_7 = arith.constant 0 : index
    %c0_8 = arith.constant 0 : index
    %15 = vector.load %arg4[%c0_7, %c0_8] : memref<1x8xi32, #tpu.memory_space<vmem>>, vector<1x8xi32>
    tpu.vector_store %arg4[%c0_7, %c0_8], %14 {strides = array<i32>} : memref<1x8xi32, #tpu.memory_space<vmem>>, vector<1x8xi32>,
    %cst_9 = arith.constant 1.000000e+00 : f32
    %16 = vector.broadcast %cst_9 : f32 to vector<1x32xf32>
    %17 = arith.mulf %0, %0 : vector<8x32xf32>
    %cst_10 = arith.constant dense<0.000000e+00> : vector<1x8xf32>
    %18 = tpu.matmul %16, %17, %cst_10 {dimension_numbers = #tpu.dot_dimension_numbers<[1], [1], [0], [0], [0, 0, 1, 0], [], []>} : vector<1x32xf32>, vector<8x32xf32>, vector<1x8xf32> -> vector<1x8xf32>
    %cst_11 = arith.constant 2.000000e+00 : f32
    %19 = vector.broadcast %cst_11 : f32 to vector<1x8xf32>
    %20 = arith.mulf %19, %7 : vector<1x8xf32>
    %21 = arith.subf %18, %20 : vector<1x8xf32>
    %cst_12 = arith.constant 0.000000e+00 : f32
    %22 = vector.broadcast %cst_12 : f32 to vector<1x8xf32>
    %23 = arith.maximumf %21, %22 : vector<1x8xf32>
    %c0_13 = arith.constant 0 : index
    %c0_14 = arith.constant 0 : index
    %24 = vector.load %arg5[%c0_13, %c0_14] : memref<1x8xf32, #tpu.memory_space<vmem>>, vector<1x8xf32>
    tpu.vector_store %arg5[%c0_13, %c0_14], %23 {strides = array<i32>} : memref<1x8xf32, #tpu.memory_space<vmem>>, vector<1x8xf32>,
    return
  }
  func.func @transform_0(%arg0: i32) -> (i32, i32) {
    %c0_i32 = arith.constant 0 : i32
    %c0_i32_0 = arith.constant 0 : i32
    return %arg0, %c0_i32 : i32, i32
  }
  func.func @transform_1(%arg0: i32) -> (i32, i32) {
    %c0_i32 = arith.constant 0 : i32
    %c0_i32_0 = arith.constant 0 : i32
    %c0_i32_1 = arith.constant 0 : i32
    return %c0_i32, %c0_i32_0 : i32, i32
  }
  func.func @transform_2(%arg0: i32) -> (i32, i32) {
    %c0_i32 = arith.constant 0 : i32
    %c0_i32_0 = arith.constant 0 : i32
    %c0_i32_1 = arith.constant 0 : i32
    return %c0_i32, %c0_i32_0 : i32, i32
  }
  func.func @transform_3(%arg0: i32) -> (i32, i32) {
    %c0_i32 = arith.constant 0 : i32
    %c0_i32_0 = arith.constant 0 : i32
    return %c0_i32, %arg0 : i32, i32
  }
  func.func @transform_4(%arg0: i32) -> (i32, i32) {
    %c0_i32 = arith.constant 0 : i32
    %c0_i32_0 = arith.constant 0 : i32
    return %c0_i32, %arg0 : i32, i32
  }
}

</mosaic_0001>

<llo_original>
// kernel: tpu_custom_call.1
$region0: #{tpu_custom_call.1}
  #allocation0 [shape = 'u32[]', space=smem, size = 0x4, offset = 0x4, fixed_abs, tag = 'smem constant byte address 0x4 - core index']
  #allocation1 [shape = 'u32[144,128]{1,0:T(1,128)}', space=vmem, size = 0x12000, scoped, tag = 'internal scratch']
  %s0 = inlined_call_operand.hbm [shape: f32[8,32], index: 0, kind: input, shape index: {}]
  %s1 = inlined_call_operand.vmem [shape: f32[16,32], index: 1, kind: input, shape index: {}]
  %s2 = inlined_call_operand.vmem [shape: f32[16,1], index: 2, kind: input, shape index: {}]
  %s3 = inlined_call_operand.hbm [shape: s32[1,8], index: 3, kind: output, shape index: {0}]
  %s4 = inlined_call_operand.hbm [shape: f32[1,8], index: 4, kind: output, shape index: {1}]
  %5 = xla_tuple %s3, %s4
  %s6 = sld [smem:[#allocation0]]
  $region34: #{tpu_custom_call.1} parent=0
    _
  %s8 = ssub.s32 1, %s6
  %s9 = scalar_select 0, %s8, %s6
  $region1: #{tpu_custom_call.1} parent=0
    #allocation2 [shape = 'u8[4096]{0}', space=vmem, size = 0x1000, scoped, tag = 'input window, operand 0, single buffered']
    #allocation3 [shape = 's32[1]{0}', space=sflag, size = 0x4, scoped, tag = 'scoped memory for tpu_custom_call.1']
    #allocation4 [shape = 's32[1]{0}', space=sflag, size = 0x4, scoped, tag = 'scoped memory for tpu_custom_call.1']
    #allocation5 [shape = 'u8[512]{0}', space=vmem, size = 0x400, scoped, tag = 'output window, operand 0, single buffered']
    #allocation6 [shape = 'u8[512]{0}', space=vmem, size = 0x400, scoped, tag = 'output window, operand 1, single buffered']
    #allocation7 [shape = 's32[1]{0}', space=sflag, size = 0x4, scoped, tag = 'scoped memory for tpu_custom_call.1']
    %10 = vsyncpa [#allocation3], 0
    %11 = vsyncpa [#allocation4], 0
    %12 = vsyncpa [#allocation7], 0
    // Predicated region
    $region2: #{tpu_custom_call.1} parent=1 // pred_check
      _
    $region3: #{tpu_custom_call.1} parent=1 // pred_check_branch
      %14 = sbr.rel (0) target = $region5
    $region4: #{tpu_custom_call.1} parent=1 // pred_region
      %s16 = ssub.s32 128, 128
      %17 = vsyncadd [#allocation3], %s16
      %s19 = sshll.u32 [#allocation2], 4
      %s20 = int_to_ptr.vmem [resolvable:$true] %s19
      %22 = dma.hbm_to_vmem [thread:$0]  %s0, 128, %s20, [#allocation3]
    $region5: #{tpu_custom_call.1} parent=1 // pred_fallthru
      _
    // Predicated region
    $region6: #{tpu_custom_call.1} parent=1 // pred_check
      _
    $region7: #{tpu_custom_call.1} parent=1 // pred_check_branch
      %24 = sbr.rel (0) target = $region9
    $region8: #{tpu_custom_call.1} parent=1 // pred_region
      _
    $region9: #{tpu_custom_call.1} parent=1 // pred_fallthru
      _
    // Predicated region
    $region10: #{tpu_custom_call.1} parent=1 // pred_check
      _
    $region11: #{tpu_custom_call.1} parent=1 // pred_check_branch
      %26 = sbr.rel (0) target = $region13
    $region12: #{tpu_custom_call.1} parent=1 // pred_region
      _
    $region13: #{tpu_custom_call.1} parent=1 // pred_fallthru
      _
    // Predicated region
    $region14: #{tpu_custom_call.1} parent=1 // pred_check
      _
    $region15: #{tpu_custom_call.1} parent=1 // pred_check_branch
      %28 = sbr.rel (0) target = $region17
    $region16: #{tpu_custom_call.1} parent=1 // pred_region
      %29 = dma.done [#allocation3], 128
    $region17: #{tpu_custom_call.1} parent=1 // pred_fallthru
      _
    %v30 = vld [vmem:[#allocation2] sm:$0xff]
    %v31 = vld [vmem:[%s1] sm:$0xff]
    %v32 = vld [vmem:[%s1 + $0x8] sm:$0xff]
    %v33 = vld [vmem:[%s2] sm:$0xff]
    %v34 = vld [vmem:[%s2 + $0x8] sm:$0xff]
    %vm35 = vcmask 261120
    %v37 = vsel %vm35, %v31, 0
    %v40 = vsel %vm35, %v32, 0
    %v43 = vsel %vm35, %v30, 0
    %45 = vmatprep.subr.mxu0 0.0
    %46 = vmatpush1.xpose.msra.mxu0 %v43
    %47 = vmatprep.subr.mxu0 0.0
    %48 = vmatpush1.xpose.msra.mxu0 0.0
    %49 = vmatprep.subr.mxu0 0.0
    %50 = vmatpush1.xpose.msra.mxu0 0.0
    %51 = vmatprep.subr.mxu0 0.0
    %52 = vmatpush1.xpose.msra.mxu0 0.0
    %53 = vmatprep.subr.mxu0 0.0
    %54 = vmatpush1.xpose.msra.mxu0 0.0
    %55 = vmatprep.subr.mxu0 0.0
    %56 = vmatpush1.xpose.msra.mxu0 0.0
    %57 = vmatprep.subr.mxu0 0.0
    %58 = vmatpush1.xpose.msra.mxu0 0.0
    %59 = vmatprep.subr.mxu0 0.0
    %60 = vmatpush1.xpose.msra.mxu0 0.0
    %61 = vmatprep.subr.mxu0 0.0
    %62 = vmatpush1.xpose.msra.mxu0 0.0
    %63 = vmatprep.subr.mxu0 0.0
    %64 = vmatpush1.xpose.msra.mxu0 0.0
    %65 = vmatprep.subr.mxu0 0.0
    %66 = vmatpush1.xpose.msra.mxu0 0.0
    %67 = vmatprep.subr.mxu0 0.0
    %68 = vmatpush1.xpose.msra.mxu0 0.0
    %69 = vmatprep.subr.mxu0 0.0
    %70 = vmatpush1.xpose.msra.mxu0 0.0
    %71 = vmatprep.subr.mxu0 0.0
    %72 = vmatpush1.xpose.msra.mxu0 0.0
    %73 = vmatprep.subr.mxu0 0.0
    %74 = vmatpush1.xpose.msra.mxu0 0.0
    %75 = vmatprep.subr.mxu0 0.0
    %76 = vmatpush1.xpose.msra.mxu0 0.0
    %77 = vmatprep.subr.mxu0 0.0
    %78 = vmatpush1.xpose.msra.mxu0 0.0
    %79 = vmatprep.subr.mxu0 0.0
    %80 = vmatpush1.xpose.msra.mxu0 0.0
    %81 = vmatprep.subr.mxu0 0.0
    %82 = vmatpush1.xpose.msra.mxu0 0.0
    %83 = vmatprep.subr.mxu0 0.0
    %84 = vmatpush1.xpose.msra.mxu0 0.0
    %85 = vmatprep.subr.mxu0 0.0
    %86 = vmatpush1.xpose.msra.mxu0 0.0
    %87 = vmatprep.subr.mxu0 0.0
    %88 = vmatpush1.xpose.msra.mxu0 0.0
    %89 = vmatprep.subr.mxu0 0.0
    %90 = vmatpush1.xpose.msra.mxu0 0.0
    %91 = vmatprep.subr.mxu0 0.0
    %92 = vmatpush1.xpose.msra.mxu0 0.0
    %93 = vmatprep.subr.mxu0 0.0
    %94 = vmatpush1.xpose.msra.mxu0 0.0
    %95 = vmatprep.subr.mxu0 0.0
    %96 = vmatpush1.xpose.msra.mxu0 0.0
    %97 = vmatprep.subr.mxu0 0.0
    %98 = vmatpush1.xpose.msra.mxu0 0.0
    %99 = vmatprep.subr.mxu0 0.0
    %100 = vmatpush1.xpose.msra.mxu0 0.0
    %101 = vmatprep.subr.mxu0 0.0
    %102 = vmatpush1.xpose.msra.mxu0 0.0
    %103 = vmatprep.subr.mxu0 0.0
    %104 = vmatpush1.xpose.msra.mxu0 0.0
    %105 = vmatprep.subr.mxu0 0.0
    %106 = vmatpush1.xpose.msra.mxu0 0.0
    %107 = vmatprep.subr.mxu0 0.0
    %108 = vmatpush1.xpose.msra.mxu0 0.0
    %109 = vmatprep.mubr.f32.mxu0 0.0
    %110 = vmatmul.mubr.f32.gmra.mrb[0].mxu0 %v37
    %v111 = vpop.f32.mrb[0].mxu0
    %v112 = vadd.f32 0.0, %v111
    %v113 = vpop.f32.mrb[0].mxu0
    %114 = vmatprep.mubr.f32.mxu0 0.0
    %115 = vmatmul.mubr.f32.gmra.mrb[0].mxu0 %v40
    %v116 = vpop.f32.mrb[0].mxu0
    %v117 = vadd.f32 0.0, %v116
    %v118 = vpop.f32.mrb[0].mxu0
    %119 = vdwg.mxu0
    %121 = vset.pattern.permute.xlu0 0
    %122 = vperm.xlu0 %121, %v33
    %v123 = vpop.permute.xlu0 %122
    %126 = vset.pattern.permute.xlu0 0
    %127 = vperm.xlu0 %126, %v34
    %v128 = vpop.permute.xlu0 %127
    %v130 = vsub.f32 %v112, %v123
    %v131 = vsub.f32 %v117, %v128
    %vm132 = vcmask 64512
    %v133 = vsel %vm132, %v130, -inf
    %v134 = vsel %vm132, %v131, -inf
    %v135 = vmax.f32 %v133, %v134
    %v136 = vrot.slane %v135, 4
    %v137 = vmax.f32 %v135, %v136
    %v138 = vrot.slane %v137, 2
    %v139 = vmax.f32 %v137, %v138
    %v140 = vrot.slane %v139, 1
    %v141 = vmax.f32 %v139, %v140
    %v142 = vlaneseq
    %v143 = vshrl.u32 %v142, 7
    %v144 = vadd.s32 %v143, 8
    %vm145 = vcmp.ge.f32.partialorder %v130, %v141
    %vm146 = vcmp.ge.f32.partialorder %v131, %v141
    %v147 = vsel %vm145, %v143, 16
    %v148 = vsel %vm146, %v144, 16
    %v149 = vsel %vm132, %v147, 2147483647
    %v150 = vsel %vm132, %v148, 2147483647
    %vm151 = vcmp.lt.s32.totalorder %v149, %v150
    %v152 = vsel %vm151, %v149, %v150
    %v153 = vrot.slane %v152, 4
    %vm154 = vcmp.lt.s32.totalorder %v152, %v153
    %v155 = vsel %vm154, %v152, %v153
    %v156 = vrot.slane %v155, 2
    %vm157 = vcmp.lt.s32.totalorder %v155, %v156
    %v158 = vsel %vm157, %v155, %v156
    %v159 = vrot.slane %v158, 1
    %vm160 = vcmp.lt.s32.totalorder %v158, %v159
    %v161 = vsel %vm160, %v158, %v159
    %vm162 = vcmask 57344
    %163 = vst.msk [vmem:[#allocation5] sm:$0x1] %vm162, %v161
    %v164 = vmul.f32 %v30, %v30
    %v166 = vsel %vm35, 1.0, 0
    %v169 = vsel %vm35, %v164, 0
    %171 = vmatprep.subr.mxu0 0.0
    %172 = vmatpush1.xpose.msra.mxu0 %v169
    %173 = vmatprep.subr.mxu0 0.0
    %174 = vmatpush1.xpose.msra.mxu0 0.0
    %175 = vmatprep.subr.mxu0 0.0
    %176 = vmatpush1.xpose.msra.mxu0 0.0
    %177 = vmatprep.subr.mxu0 0.0
    %178 = vmatpush1.xpose.msra.mxu0 0.0
    %179 = vmatprep.subr.mxu0 0.0
    %180 = vmatpush1.xpose.msra.mxu0 0.0
    %181 = vmatprep.subr.mxu0 0.0
    %182 = vmatpush1.xpose.msra.mxu0 0.0
    %183 = vmatprep.subr.mxu0 0.0
    %184 = vmatpush1.xpose.msra.mxu0 0.0
    %185 = vmatprep.subr.mxu0 0.0
    %186 = vmatpush1.xpose.msra.mxu0 0.0
    %187 = vmatprep.subr.mxu0 0.0
    %188 = vmatpush1.xpose.msra.mxu0 0.0
    %189 = vmatprep.subr.mxu0 0.0
    %190 = vmatpush1.xpose.msra.mxu0 0.0
    %191 = vmatprep.subr.mxu0 0.0
    %192 = vmatpush1.xpose.msra.mxu0 0.0
    %193 = vmatprep.subr.mxu0 0.0
    %194 = vmatpush1.xpose.msra.mxu0 0.0
    %195 = vmatprep.subr.mxu0 0.0
    %196 = vmatpush1.xpose.msra.mxu0 0.0
    %197 = vmatprep.subr.mxu0 0.0
    %198 = vmatpush1.xpose.msra.mxu0 0.0
    %199 = vmatprep.subr.mxu0 0.0
    %200 = vmatpush1.xpose.msra.mxu0 0.0
    %201 = vmatprep.subr.mxu0 0.0
    %202 = vmatpush1.xpose.msra.mxu0 0.0
    %203 = vmatprep.subr.mxu0 0.0
    %204 = vmatpush1.xpose.msra.mxu0 0.0
    %205 = vmatprep.subr.mxu0 0.0
    %206 = vmatpush1.xpose.msra.mxu0 0.0
    %207 = vmatprep.subr.mxu0 0.0
    %208 = vmatpush1.xpose.msra.mxu0 0.0
    %209 = vmatprep.subr.mxu0 0.0
    %210 = vmatpush1.xpose.msra.mxu0 0.0
    %211 = vmatprep.subr.mxu0 0.0
    %212 = vmatpush1.xpose.msra.mxu0 0.0
    %213 = vmatprep.subr.mxu0 0.0
    %214 = vmatpush1.xpose.msra.mxu0 0.0
    %215 = vmatprep.subr.mxu0 0.0
    %216 = vmatpush1.xpose.msra.mxu0 0.0
    %217 = vmatprep.subr.mxu0 0.0
    %218 = vmatpush1.xpose.msra.mxu0 0.0
    %219 = vmatprep.subr.mxu0 0.0
    %220 = vmatpush1.xpose.msra.mxu0 0.0
    %221 = vmatprep.subr.mxu0 0.0
    %222 = vmatpush1.xpose.msra.mxu0 0.0
    %223 = vmatprep.subr.mxu0 0.0
    %224 = vmatpush1.xpose.msra.mxu0 0.0
    %225 = vmatprep.subr.mxu0 0.0
    %226 = vmatpush1.xpose.msra.mxu0 0.0
    %227 = vmatprep.subr.mxu0 0.0
    %228 = vmatpush1.xpose.msra.mxu0 0.0
    %229 = vmatprep.subr.mxu0 0.0
    %230 = vmatpush1.xpose.msra.mxu0 0.0
    %231 = vmatprep.subr.mxu0 0.0
    %232 = vmatpush1.xpose.msra.mxu0 0.0
    %233 = vmatprep.subr.mxu0 0.0
    %234 = vmatpush1.xpose.msra.mxu0 0.0
    %235 = vmatprep.mubr.f32.mxu0 0.0
    %236 = vmatmul.mubr.f32.gmra.mrb[0].mxu0 %v166
    %v237 = vpop.f32.mrb[0].mxu0
    %v238 = vadd.f32 0.0, %v237
    %v239 = vpop.f32.mrb[0].mxu0
    %240 = vdwg.mxu0
    %v241 = vmul.f32 %v141, 2.0
    %v242 = vsub.f32 %v238, %v241
    %v243 = vmax.f32 %v242, 0.0
    %244 = vst.msk [vmem:[#allocation6] sm:$0x1] %vm162, %v243
    // Predicated region
    $region18: #{tpu_custom_call.1} parent=1 // pred_check
      _
    $region19: #{tpu_custom_call.1} parent=1 // pred_check_branch
      %246 = sbr.rel (0) target = $region21
    $region20: #{tpu_custom_call.1} parent=1 // pred_region
      %s248 = ssub.s32 16, 16
      %249 = vsyncadd [#allocation4], %s248
      %s251 = sshll.u32 [#allocation5], 4
      %s252 = int_to_ptr.vmem [resolvable:$true] %s251
      %254 = dma.vmem_to_hbm [thread:$0]  %s252, 16, %s3, [#allocation4]
    $region21: #{tpu_custom_call.1} parent=1 // pred_fallthru
      _
    // Predicated region
    $region22: #{tpu_custom_call.1} parent=1 // pred_check
      _
    $region23: #{tpu_custom_call.1} parent=1 // pred_check_branch
      %256 = sbr.rel (0) target = $region25
    $region24: #{tpu_custom_call.1} parent=1 // pred_region
      %s258 = ssub.s32 16, 16
      %259 = vsyncadd [#allocation7], %s258
      %s261 = sshll.u32 [#allocation6], 4
      %s262 = int_to_ptr.vmem [resolvable:$true] %s261
      %264 = dma.vmem_to_hbm [thread:$0]  %s262, 16, %s4, [#allocation7]
    $region25: #{tpu_custom_call.1} parent=1 // pred_fallthru
      _
    // Predicated region
    $region26: #{tpu_custom_call.1} parent=1 // pred_check
      _
    $region27: #{tpu_custom_call.1} parent=1 // pred_check_branch
      %266 = sbr.rel (0) target = $region29
    $region28: #{tpu_custom_call.1} parent=1 // pred_region
      %267 = dma.done [#allocation4], 16
    $region29: #{tpu_custom_call.1} parent=1 // pred_fallthru
      _
    // Predicated region
    $region30: #{tpu_custom_call.1} parent=1 // pred_check
      _
    $region31: #{tpu_custom_call.1} parent=1 // pred_check_branch
      %269 = sbr.rel (0) target = $region33
    $region32: #{tpu_custom_call.1} parent=1 // pred_region
      %270 = dma.done [#allocation7], 16
    $region33: #{tpu_custom_call.1} parent=1 // pred_fallthru
      _
    %271 = vsyncpa [#allocation3], 1
    %272 = vsyncpa [#allocation4], 1
    %273 = vsyncpa [#allocation7], 1

</llo_original>
